<compile_context>
chip_gen: v7x
topology: tpu7x:2x2x1
jax: 0.10.0
libtpu: 0.0.40
codegen_flags: <defaults>
</compile_context>

<pallas_src>
import jax
import jax.numpy as jnp
from jax.experimental import pallas as pl
from jax.experimental.pallas import tpu as pltpu


def _pe_add_kernel(x_ref, pe_ref, o_ref):
    # x_ref/o_ref: (rb, N) row block; pe_ref: (1, N) full flattened PE table.
    # (1, N) broadcasts against (rb, N) with no explicit broadcast op.
    o_ref[...] = x_ref[...] + pe_ref[...]


# Per-block byte budget for the row-tiled path (x block).  With 2-deep
# double-buffering of x and out plus the resident PE table this stays well
# under the default scoped-VMEM limit on every TPU generation (incl. v5e's
# 16 MiB); raise pltpu.CompilerParams(vmem_limit_bytes=...) if you enlarge it.
_BLOCK_BYTE_BUDGET = 2 * 1024 * 1024


def positional_encoding_forward(x, pe_weight):
    """x: (B, S, D); pe_weight: (S, D). Returns x + pe_weight[None]."""
    B, S, D = x.shape
    assert pe_weight.shape == (S, D)

    N = S * D
    itemsize = jnp.dtype(x.dtype).itemsize

    # Lane-dense flattening: last dim becomes S*D (a multiple of 128 for the
    # demo shape; for a single full block the (8,128) constraint is waived
    # anyway since the block equals the full array dims).
    x2 = x.reshape(B, N)
    pe2 = pe_weight.reshape(1, N)

    # Row-block selection over the batch axis of the flattened view.
    if B * N * itemsize <= _BLOCK_BYTE_BUDGET:
        rb = B  # single block, grid of one step: pure copy-add, minimal overhead
    else:
        rb = (_BLOCK_BYTE_BUDGET // (N * itemsize)) // 8 * 8
        rb = int(max(8, min(rb, B)))
        if B % rb != 0:
            # Keep the grid exact; fall back to one full block (still correct,
            # just a bigger VMEM footprint).
            rb = B
    grid = (B // rb,)

    out2 = pl.pallas_call(
        _pe_add_kernel,
        out_shape=jax.ShapeDtypeStruct((B, N), x.dtype),
        grid_spec=pltpu.PrefetchScalarGridSpec(
            num_scalar_prefetch=0,
            grid=grid,
            in_specs=[
                # One row block of x per grid step.
                pl.BlockSpec((rb, N), lambda i: (i, 0)),
                # PE table: same block every step -> stays resident in VMEM.
                pl.BlockSpec((1, N), lambda i: (0, 0)),
            ],
            out_specs=pl.BlockSpec((rb, N), lambda i: (i, 0)),
        ),
        compiler_params=pltpu.CompilerParams(
            # Row blocks are independent; lets megacore (v7x 2 TCs) shard them.
            dimension_semantics=("parallel",),
        ),
    )(x2, pe2)

    return out2.reshape(B, S, D)


if __name__ == "__main__":
    # Small shapes consistent with the module: batch=2, segment_length=8, token_dim=32.
    B, S, D = 2, 8, 32

    key = jax.random.PRNGKey(0)
    kx, kw = jax.random.split(key)

    # Deterministic "nn.Embedding" weight: standard normal, shape (S, D).
    pe_weight = jax.random.normal(kw, (S, D), dtype=jnp.float32)
    x = jax.random.normal(kx, (B, S, D), dtype=jnp.float32)

    out = positional_encoding_forward(x, pe_weight)
    out = jax.block_until_ready(out)

    # Pure-JAX reference check of the broadcasted add semantics.
    ref = x + pe_weight[None, :, :]
    assert out.shape == (B, S, D)
    assert jnp.allclose(out, ref, atol=1e-6), "mismatch vs reference"

    print("KERNEL_OK")
</pallas_src>

<mosaic_0001>
module attributes {stable_mosaic.version = 11 : i64} {
  func.func @_pe_add_kernel(%arg0: i32, %arg1: memref<2x256xf32, #tpu.memory_space<vmem>>, %arg2: memref<1x256xf32, #tpu.memory_space<vmem>>, %arg3: memref<2x256xf32, #tpu.memory_space<vmem>>) attributes {dimension_semantics = [#tpu.dimension_semantics<parallel>], iteration_bounds = array<i64: 1>, scalar_prefetch = 0 : i64, scratch_operands = 0 : i64, tpu.core_type = #tpu.core_type<tc>, window_params = [{transform_indices = @transform_0, window_bounds = array<i64: 2, 256>}, {pipeline_mode = #tpu.pipeline_mode<synchronous>, transform_indices = @transform_1, window_bounds = array<i64: 1, 256>}, {transform_indices = @transform_2, window_bounds = array<i64: 2, 256>}]} {
    %c0 = arith.constant 0 : index
    %c0_0 = arith.constant 0 : index
    %0 = vector.load %arg1[%c0, %c0_0] : memref<2x256xf32, #tpu.memory_space<vmem>>, vector<2x256xf32>
    %c0_1 = arith.constant 0 : index
    %c0_2 = arith.constant 0 : index
    %1 = vector.load %arg2[%c0_1, %c0_2] : memref<1x256xf32, #tpu.memory_space<vmem>>, vector<1x256xf32>
    %2 = vector.broadcast %1 : vector<1x256xf32> to vector<2x256xf32>
    %3 = arith.addf %0, %2 : vector<2x256xf32>
    %c0_3 = arith.constant 0 : index
    %c0_4 = arith.constant 0 : index
    %4 = vector.load %arg3[%c0_3, %c0_4] : memref<2x256xf32, #tpu.memory_space<vmem>>, vector<2x256xf32>
    tpu.vector_store %arg3[%c0_3, %c0_4], %3 {strides = array<i32>} : memref<2x256xf32, #tpu.memory_space<vmem>>, vector<2x256xf32>,
    return
  }
  func.func @transform_0(%arg0: i32) -> (i32, i32) {
    %c0_i32 = arith.constant 0 : i32
    %c0_i32_0 = arith.constant 0 : i32
    return %arg0, %c0_i32 : i32, i32
  }
  func.func @transform_1(%arg0: i32) -> (i32, i32) {
    %c0_i32 = arith.constant 0 : i32
    %c0_i32_0 = arith.constant 0 : i32
    %c0_i32_1 = arith.constant 0 : i32
    return %c0_i32, %c0_i32_0 : i32, i32
  }
  func.func @transform_2(%arg0: i32) -> (i32, i32) {
    %c0_i32 = arith.constant 0 : i32
    %c0_i32_0 = arith.constant 0 : i32
    return %arg0, %c0_i32 : i32, i32
  }
}

</mosaic_0001>

<llo_original>
// kernel: tpu_custom_call.1
$region0: #{tpu_custom_call.1}
  #allocation0 [shape = 'u32[]', space=smem, size = 0x4, offset = 0x4, fixed_abs, tag = 'smem constant byte address 0x4 - core index']
  #allocation1 [shape = 'u32[144,128]{1,0:T(1,128)}', space=vmem, size = 0x12000, scoped, tag = 'internal scratch']
  %s0 = inlined_call_operand.hbm [shape: f32[2,256], index: 0, kind: input, shape index: {}]
  %s1 = inlined_call_operand.vmem [shape: f32[1,256], index: 1, kind: input, shape index: {}]
  %s2 = inlined_call_operand.hbm [shape: f32[2,256], index: 2, kind: output, shape index: {}]
  %s3 = sld [smem:[#allocation0]]
  $region22: #{tpu_custom_call.1} parent=0
    _
  %s5 = ssub.s32 1, %s3
  %s6 = scalar_select 0, %s5, %s3
  $region1: #{tpu_custom_call.1} parent=0
    #allocation2 [shape = 'u8[2048]{0}', space=vmem, size = 0x800, scoped, tag = 'input window, operand 0, single buffered']
    #allocation3 [shape = 's32[1]{0}', space=sflag, size = 0x4, scoped, tag = 'scoped memory for tpu_custom_call.1']
    #allocation4 [shape = 's32[1]{0}', space=sflag, size = 0x4, scoped, tag = 'scoped memory for tpu_custom_call.1']
    #allocation5 [shape = 'u8[2048]{0}', space=vmem, size = 0x800, scoped, tag = 'output window, operand 0, single buffered']
    %7 = vsyncpa [#allocation3], 0
    %8 = vsyncpa [#allocation4], 0
    // Predicated region
    $region2: #{tpu_custom_call.1} parent=1 // pred_check
      _
    $region3: #{tpu_custom_call.1} parent=1 // pred_check_branch
      %10 = sbr.rel (0) target = $region5
    $region4: #{tpu_custom_call.1} parent=1 // pred_region
      %s12 = ssub.s32 64, 64
      %13 = vsyncadd [#allocation3], %s12
      %s15 = sshll.u32 [#allocation2], 4
      %s16 = int_to_ptr.vmem [resolvable:$true] %s15
      %18 = dma.hbm_to_vmem [thread:$0]  %s0, 64, %s16, [#allocation3]
    $region5: #{tpu_custom_call.1} parent=1 // pred_fallthru
      _
    // Predicated region
    $region6: #{tpu_custom_call.1} parent=1 // pred_check
      _
    $region7: #{tpu_custom_call.1} parent=1 // pred_check_branch
      %20 = sbr.rel (0) target = $region9
    $region8: #{tpu_custom_call.1} parent=1 // pred_region
      _
    $region9: #{tpu_custom_call.1} parent=1 // pred_fallthru
      _
    // Predicated region
    $region10: #{tpu_custom_call.1} parent=1 // pred_check
      _
    $region11: #{tpu_custom_call.1} parent=1 // pred_check_branch
      %22 = sbr.rel (0) target = $region13
    $region12: #{tpu_custom_call.1} parent=1 // pred_region
      %23 = dma.done [#allocation3], 64
    $region13: #{tpu_custom_call.1} parent=1 // pred_fallthru
      _
    %v24 = vld [vmem:[#allocation2] sm:$0xf]
    %v25 = vld [vmem:[%s1] sm:$0x3]
    %v27 = vlaneseq
    %v28 = vshrl.u32 %v27, 7
    %v29 = vsub.s32 0, %v28
    %v30 = vrot.slane %v25, %v29
    %v31 = vlaneseq
    %v32 = vshrl.u32 %v31, 7
    %v33 = vsub.s32 1, %v32
    %v34 = vrot.slane %v25, %v33
    %v35 = vcombine.low %v30, %v34
    %v37 = vunpack.c.l.s4 1983009808
    %v38 = vunpack.c.0.s8 %v37
    %v39 = vlaneseq
    %v40 = vshrl.u32 %v39, 7
    %v41 = vsub.s32 %v38, %v40
    %v42 = vrot.slane %v35, %v41
    %v44 = vadd.f32 %v24, %v42
    %45 = vst [vmem:[#allocation5] sm:$0xf] %v44
    // Predicated region
    $region14: #{tpu_custom_call.1} parent=1 // pred_check
      _
    $region15: #{tpu_custom_call.1} parent=1 // pred_check_branch
      %47 = sbr.rel (0) target = $region17
    $region16: #{tpu_custom_call.1} parent=1 // pred_region
      %s49 = ssub.s32 64, 64
      %50 = vsyncadd [#allocation4], %s49
      %s52 = sshll.u32 [#allocation5], 4
      %s53 = int_to_ptr.vmem [resolvable:$true] %s52
      %55 = dma.vmem_to_hbm [thread:$0]  %s53, 64, %s2, [#allocation4]
    $region17: #{tpu_custom_call.1} parent=1 // pred_fallthru
      _
    // Predicated region
    $region18: #{tpu_custom_call.1} parent=1 // pred_check
      _
    $region19: #{tpu_custom_call.1} parent=1 // pred_check_branch
      %57 = sbr.rel (0) target = $region21
    $region20: #{tpu_custom_call.1} parent=1 // pred_region
      %58 = dma.done [#allocation4], 64
    $region21: #{tpu_custom_call.1} parent=1 // pred_fallthru
      _
    %59 = vsyncpa [#allocation3], 1
    %60 = vsyncpa [#allocation4], 1

</llo_original>
